<compile_context>
chip_gen: v7x
topology: tpu7x:2x2x1
jax: 0.10.0
libtpu: 0.0.40
codegen_flags: <defaults>
</compile_context>

<pallas_src>
import functools

import jax
import jax.numpy as jnp
import numpy as np
from jax.experimental import pallas as pl
from jax.experimental.pallas import tpu as pltpu


def twice_conv_kernel(xp_ref, a1_ref, t1_ref, a2_ref, t2_ref, o_ref, mid_ref):
    """One batch-block per grid step.

    xp_ref : (nb, H+2, W*Cin)    bf16, row-padded input (rows 0 and H+1 are 0)
    a1_ref : (3, W*Cin, W*Cout)  bf16, conv1 banded weights (BN1 scale folded in)
    t1_ref : (1, W*Cout)         f32, BN1 shift (includes conv1 bias)
    a2_ref : (3, W*Cout, W*Cout) bf16, conv2 banded weights (BN2 scale folded in)
    t2_ref : (1, W*Cout)         f32, BN2 shift (includes conv2 bias)
    o_ref  : (nb, H, W*Cout)     f32 output (lane-dense)
    mid_ref: (nb, H+2, W*Cout)   f32 VMEM scratch, row-padded intermediate
    """
    nb, hp, wcin = xp_ref.shape
    h = hp - 2
    wcout = o_ref.shape[-1]
    m = nb * h

    # ---- conv1 + BN1 + ReLU : 3 matmuls, one per kernel row dy ----
    acc = jnp.zeros((m, wcout), jnp.float32)
    for dy in range(3):
        lhs = xp_ref[:, dy:dy + h, :].reshape(m, wcin)          # bf16
        acc += jnp.dot(lhs, a1_ref[dy], preferred_element_type=jnp.float32)
    y1 = jnp.maximum(acc + t1_ref[...], 0.0)                    # (m, W*Cout) f32

    # Row-padded, lane-dense intermediate in VMEM. Only the 2 border rows need
    # zeroing (the W halo is already folded into the banded weights); the
    # interior is fully overwritten every step.
    zero_row = jnp.zeros((nb, 1, wcout), jnp.float32)
    mid_ref[:, 0:1, :] = zero_row
    mid_ref[:, hp - 1:hp, :] = zero_row
    mid_ref[:, 1:h + 1, :] = y1.reshape(nb, h, wcout)

    # ---- conv2 + BN2 + ReLU ----
    acc = jnp.zeros((m, wcout), jnp.float32)
    for dy in range(3):
        lhs = mid_ref[:, dy:dy + h, :].reshape(m, wcout).astype(jnp.bfloat16)
        acc += jnp.dot(lhs, a2_ref[dy], preferred_element_type=jnp.float32)
    y2 = jnp.maximum(acc + t2_ref[...], 0.0)

    o_ref[...] = y2.reshape(nb, h, wcout)                       # full-lane store


def _fold_bn_into_conv(w_hwio, bias, gamma, beta, mean, var, eps=1e-5):
    """Fold inference-mode BN into (scaled conv weights, per-channel shift)."""
    s = gamma * jax.lax.rsqrt(var + eps)            # (Cout,)
    shift = (bias - mean) * s + beta                # (Cout,)
    return w_hwio * s, shift


def _banded_weights(w_hwio, width):
    """(3,3,Cin,Cout) conv weights -> (3, W*Cin, W*Cout) banded block-Toeplitz
    matrices (one per kernel row dy). The dx taps and the SAME zero padding
    along W are encoded in the band structure:
      A[dy, wi*Cin+ci, wo*Cout+co] = w[dy, wi-wo+1, ci, co] if 0<=wi-wo+1<=2."""
    _, _, cin, cout = w_hwio.shape
    wi = jnp.arange(width)[:, None]                 # input column
    wo = jnp.arange(width)[None, :]                 # output column
    dx = wi - wo + 1                                # kernel column tap
    valid = ((dx >= 0) & (dx <= 2)).astype(w_hwio.dtype)
    band = w_hwio[:, jnp.clip(dx, 0, 2)] * valid[None, :, :, None, None]
    # (3, W_in, W_out, Cin, Cout) -> (3, W_in, Cin, W_out, Cout) -> (3, W*Cin, W*Cout)
    return band.transpose(0, 1, 3, 2, 4).reshape(3, width * cin, width * cout)


@jax.jit
def twice_conv_pallas(x_nchw, params1, params2):
    n, cin, h, w = x_nchw.shape
    cout = params1[0].shape[-1]
    hp = h + 2

    # Fold BN scale into the weights; build banded matrices; bf16 weights.
    w1s, shift1 = _fold_bn_into_conv(*params1)
    w2s, shift2 = _fold_bn_into_conv(*params2)
    a1 = _banded_weights(w1s, w).astype(jnp.bfloat16)
    a2 = _banded_weights(w2s, w).astype(jnp.bfloat16)
    t1 = jnp.tile(shift1, w)[None, :].astype(jnp.float32)   # (1, W*Cout)
    t2 = jnp.tile(shift2, w)[None, :].astype(jnp.float32)

    # NCHW -> (N, H, W*Cin) lane-flattened NHWC, bf16, rows zero-padded by 1 for
    # the 3x3 SAME halo along H (the W halo lives in the banded weights).
    xp = jnp.transpose(x_nchw, (0, 2, 3, 1)).reshape(n, h, w * cin)
    xp = jnp.pad(xp.astype(jnp.bfloat16), ((0, 0), (1, 1), (0, 0)))

    # Batch block per grid step (largest divisor of N that is <= 8).
    nb = min(8, n)
    while n % nb:
        nb -= 1

    out = pl.pallas_call(
        twice_conv_kernel,
        out_shape=jax.ShapeDtypeStruct((n, h, w * cout), jnp.float32),
        grid_spec=pltpu.PrefetchScalarGridSpec(
            num_scalar_prefetch=0,
            grid=(n // nb,),
            in_specs=[
                pl.BlockSpec((nb, hp, w * cin), lambda i: (i, 0, 0)),
                pl.BlockSpec((3, w * cin, w * cout), lambda i: (0, 0, 0)),
                pl.BlockSpec((1, w * cout), lambda i: (0, 0)),
                pl.BlockSpec((3, w * cout, w * cout), lambda i: (0, 0, 0)),
                pl.BlockSpec((1, w * cout), lambda i: (0, 0)),
            ],
            out_specs=pl.BlockSpec((nb, h, w * cout), lambda i: (i, 0, 0)),
            scratch_shapes=[pltpu.VMEM((nb, hp, w * cout), jnp.float32)],
        ),
        compiler_params=pltpu.CompilerParams(
            dimension_semantics=("parallel",)),
    )(xp, a1, t1, a2, t2)

    # (N, H, W*Cout) -> NCHW (module interface is NCHW).
    return jnp.transpose(out.reshape(n, h, w, cout), (0, 3, 1, 2))


def make_params(key, in_c, out_c):
    ks = jax.random.split(key, 12)
    # conv weights generated directly in HWIO layout (PyTorch stores OIHW).
    w1 = jax.random.normal(ks[0], (3, 3, in_c, out_c), jnp.float32) * 0.1
    b1 = jax.random.normal(ks[1], (out_c,), jnp.float32) * 0.1
    g1 = 1.0 + 0.1 * jax.random.normal(ks[2], (out_c,), jnp.float32)
    be1 = 0.1 * jax.random.normal(ks[3], (out_c,), jnp.float32)
    m1 = 0.1 * jax.random.normal(ks[4], (out_c,), jnp.float32)
    v1 = 1.0 + 0.1 * jnp.abs(jax.random.normal(ks[5], (out_c,), jnp.float32))

    w2 = jax.random.normal(ks[6], (3, 3, out_c, out_c), jnp.float32) * 0.1
    b2 = jax.random.normal(ks[7], (out_c,), jnp.float32) * 0.1
    g2 = 1.0 + 0.1 * jax.random.normal(ks[8], (out_c,), jnp.float32)
    be2 = 0.1 * jax.random.normal(ks[9], (out_c,), jnp.float32)
    m2 = 0.1 * jax.random.normal(ks[10], (out_c,), jnp.float32)
    v2 = 1.0 + 0.1 * jnp.abs(jax.random.normal(ks[11], (out_c,), jnp.float32))
    return (w1, b1, g1, be1, m1, v1), (w2, b2, g2, be2, m2, v2)


def ref_forward(x_nchw, p1, p2, eps=1e-5):
    """Pure-JAX f32 reference (inference-mode BN), NCHW in/out."""
    (w1, b1, g1, be1, m1, v1), (w2, b2, g2, be2, m2, v2) = p1, p2
    dn = ('NHWC', 'HWIO', 'NHWC')
    hi = jax.lax.Precision.HIGHEST
    x = jnp.transpose(x_nchw, (0, 2, 3, 1))
    y = jax.lax.conv_general_dilated(x, w1, (1, 1), 'SAME',
                                     dimension_numbers=dn, precision=hi) + b1
    y = (y - m1) / jnp.sqrt(v1 + eps) * g1 + be1
    y = jnp.maximum(y, 0.0)
    y = jax.lax.conv_general_dilated(y, w2, (1, 1), 'SAME',
                                     dimension_numbers=dn, precision=hi) + b2
    y = (y - m2) / jnp.sqrt(v2 + eps) * g2 + be2
    y = jnp.maximum(y, 0.0)
    return jnp.transpose(y, (0, 3, 1, 2))


if __name__ == "__main__":
    N, IN_C, OUT_C, H, W = 2, 4, 8, 16, 16

    key = jax.random.PRNGKey(0)
    kx, kp = jax.random.split(key)
    x = jax.random.normal(kx, (N, IN_C, H, W), jnp.float32)

    p1, p2 = make_params(kp, IN_C, OUT_C)

    out = twice_conv_pallas(x, p1, p2)
    out = jax.block_until_ready(out)

    ref = jax.block_until_ready(ref_forward(x, p1, p2))
    # bf16 activations/weights with f32 accumulation -> loosened tolerance.
    np.testing.assert_allclose(np.asarray(out), np.asarray(ref),
                               rtol=3e-2, atol=3e-2)

    print("KERNEL_OK")
</pallas_src>

<mosaic_0001>
module attributes {stable_mosaic.version = 11 : i64} {
  func.func @twice_conv_kernel(%arg0: i32, %arg1: memref<2x18x64xbf16, #tpu.memory_space<vmem>>, %arg2: memref<3x64x128xbf16, #tpu.memory_space<vmem>>, %arg3: memref<1x128xf32, #tpu.memory_space<vmem>>, %arg4: memref<3x128x128xbf16, #tpu.memory_space<vmem>>, %arg5: memref<1x128xf32, #tpu.memory_space<vmem>>, %arg6: memref<2x16x128xf32, #tpu.memory_space<vmem>>, %arg7: memref<2x18x128xf32, #tpu.memory_space<vmem>>) attributes {dimension_semantics = [#tpu.dimension_semantics<parallel>], iteration_bounds = array<i64: 1>, scalar_prefetch = 0 : i64, scratch_operands = 1 : i64, tpu.core_type = #tpu.core_type<tc>, window_params = [{transform_indices = @transform_0, window_bounds = array<i64: 2, 18, 64>}, {pipeline_mode = #tpu.pipeline_mode<synchronous>, transform_indices = @transform_1, window_bounds = array<i64: 3, 64, 128>}, {pipeline_mode = #tpu.pipeline_mode<synchronous>, transform_indices = @transform_2, window_bounds = array<i64: 1, 128>}, {pipeline_mode = #tpu.pipeline_mode<synchronous>, transform_indices = @transform_3, window_bounds = array<i64: 3, 128, 128>}, {pipeline_mode = #tpu.pipeline_mode<synchronous>, transform_indices = @transform_4, window_bounds = array<i64: 1, 128>}, {transform_indices = @transform_5, window_bounds = array<i64: 2, 16, 128>}]} {
    %cst = arith.constant 0.000000e+00 : f32
    %0 = vector.broadcast %cst : f32 to vector<32x128xf32>
    %c0 = arith.constant 0 : index
    %c0_0 = arith.constant 0 : index
    %c0_1 = arith.constant 0 : index
    %1 = vector.load %arg1[%c0, %c0_0, %c0_1] : memref<2x18x64xbf16, #tpu.memory_space<vmem>>, vector<2x16x64xbf16>
    %2 = vector.shape_cast %1 : vector<2x16x64xbf16> to vector<32x64xbf16>
    %c0_2 = arith.constant 0 : index
    %c0_3 = arith.constant 0 : index
    %c0_4 = arith.constant 0 : index
    %3 = vector.load %arg2[%c0_2, %c0_3, %c0_4] : memref<3x64x128xbf16, #tpu.memory_space<vmem>>, vector<1x64x128xbf16>
    %4 = vector.shape_cast %3 : vector<1x64x128xbf16> to vector<64x128xbf16>
    %cst_5 = arith.constant dense<0.000000e+00> : vector<32x128xf32>
    %5 = tpu.matmul %2, %4, %cst_5 {dimension_numbers = #tpu.dot_dimension_numbers<[1], [0], [0], [1], [0, 0, 1, 1], [], []>} : vector<32x64xbf16>, vector<64x128xbf16>, vector<32x128xf32> -> vector<32x128xf32>
    %6 = arith.addf %0, %5 : vector<32x128xf32>
    %c0_6 = arith.constant 0 : index
    %c1 = arith.constant 1 : index
    %c0_7 = arith.constant 0 : index
    %7 = vector.load %arg1[%c0_6, %c1, %c0_7] : memref<2x18x64xbf16, #tpu.memory_space<vmem>>, vector<2x16x64xbf16>
    %8 = vector.shape_cast %7 : vector<2x16x64xbf16> to vector<32x64xbf16>
    %c1_8 = arith.constant 1 : index
    %c0_9 = arith.constant 0 : index
    %c0_10 = arith.constant 0 : index
    %9 = vector.load %arg2[%c1_8, %c0_9, %c0_10] : memref<3x64x128xbf16, #tpu.memory_space<vmem>>, vector<1x64x128xbf16>
    %10 = vector.shape_cast %9 : vector<1x64x128xbf16> to vector<64x128xbf16>
    %cst_11 = arith.constant dense<0.000000e+00> : vector<32x128xf32>
    %11 = tpu.matmul %8, %10, %cst_11 {dimension_numbers = #tpu.dot_dimension_numbers<[1], [0], [0], [1], [0, 0, 1, 1], [], []>} : vector<32x64xbf16>, vector<64x128xbf16>, vector<32x128xf32> -> vector<32x128xf32>
    %12 = arith.addf %6, %11 : vector<32x128xf32>
    %c0_12 = arith.constant 0 : index
    %c2 = arith.constant 2 : index
    %c0_13 = arith.constant 0 : index
    %13 = vector.load %arg1[%c0_12, %c2, %c0_13] : memref<2x18x64xbf16, #tpu.memory_space<vmem>>, vector<2x16x64xbf16>
    %14 = vector.shape_cast %13 : vector<2x16x64xbf16> to vector<32x64xbf16>
    %c2_14 = arith.constant 2 : index
    %c0_15 = arith.constant 0 : index
    %c0_16 = arith.constant 0 : index
    %15 = vector.load %arg2[%c2_14, %c0_15, %c0_16] : memref<3x64x128xbf16, #tpu.memory_space<vmem>>, vector<1x64x128xbf16>
    %16 = vector.shape_cast %15 : vector<1x64x128xbf16> to vector<64x128xbf16>
    %cst_17 = arith.constant dense<0.000000e+00> : vector<32x128xf32>
    %17 = tpu.matmul %14, %16, %cst_17 {dimension_numbers = #tpu.dot_dimension_numbers<[1], [0], [0], [1], [0, 0, 1, 1], [], []>} : vector<32x64xbf16>, vector<64x128xbf16>, vector<32x128xf32> -> vector<32x128xf32>
    %18 = arith.addf %12, %17 : vector<32x128xf32>
    %c0_18 = arith.constant 0 : index
    %c0_19 = arith.constant 0 : index
    %19 = vector.load %arg3[%c0_18, %c0_19] : memref<1x128xf32, #tpu.memory_space<vmem>>, vector<1x128xf32>
    %20 = vector.broadcast %19 : vector<1x128xf32> to vector<32x128xf32>
    %21 = arith.addf %18, %20 : vector<32x128xf32>
    %cst_20 = arith.constant 0.000000e+00 : f32
    %22 = vector.broadcast %cst_20 : f32 to vector<32x128xf32>
    %23 = arith.maximumf %21, %22 : vector<32x128xf32>
    %cst_21 = arith.constant 0.000000e+00 : f32
    %24 = vector.broadcast %cst_21 : f32 to vector<2x1x128xf32>
    %c0_22 = arith.constant 0 : index
    %c0_23 = arith.constant 0 : index
    %c0_24 = arith.constant 0 : index
    %25 = vector.load %arg7[%c0_22, %c0_23, %c0_24] : memref<2x18x128xf32, #tpu.memory_space<vmem>>, vector<2x1x128xf32>
    tpu.vector_store %arg7[%c0_22, %c0_23, %c0_24], %24 {strides = array<i32>} : memref<2x18x128xf32, #tpu.memory_space<vmem>>, vector<2x1x128xf32>,
    %c0_25 = arith.constant 0 : index
    %c17 = arith.constant 17 : index
    %c0_26 = arith.constant 0 : index
    %26 = vector.load %arg7[%c0_25, %c17, %c0_26] : memref<2x18x128xf32, #tpu.memory_space<vmem>>, vector<2x1x128xf32>
    tpu.vector_store %arg7[%c0_25, %c17, %c0_26], %24 {strides = array<i32>} : memref<2x18x128xf32, #tpu.memory_space<vmem>>, vector<2x1x128xf32>,
    %27 = vector.shape_cast %23 : vector<32x128xf32> to vector<2x16x128xf32>
    %c0_27 = arith.constant 0 : index
    %c1_28 = arith.constant 1 : index
    %c0_29 = arith.constant 0 : index
    %28 = vector.load %arg7[%c0_27, %c1_28, %c0_29] : memref<2x18x128xf32, #tpu.memory_space<vmem>>, vector<2x16x128xf32>
    tpu.vector_store %arg7[%c0_27, %c1_28, %c0_29], %27 {strides = array<i32>} : memref<2x18x128xf32, #tpu.memory_space<vmem>>, vector<2x16x128xf32>,
    %cst_30 = arith.constant 0.000000e+00 : f32
    %29 = vector.broadcast %cst_30 : f32 to vector<32x128xf32>
    %c0_31 = arith.constant 0 : index
    %c0_32 = arith.constant 0 : index
    %c0_33 = arith.constant 0 : index
    %30 = vector.load %arg7[%c0_31, %c0_32, %c0_33] : memref<2x18x128xf32, #tpu.memory_space<vmem>>, vector<2x16x128xf32>
    %31 = vector.shape_cast %30 : vector<2x16x128xf32> to vector<32x128xf32>
    %32 = arith.truncf %31 : vector<32x128xf32> to vector<32x128xbf16>
    %c0_34 = arith.constant 0 : index
    %c0_35 = arith.constant 0 : index
    %c0_36 = arith.constant 0 : index
    %33 = vector.load %arg4[%c0_34, %c0_35, %c0_36] : memref<3x128x128xbf16, #tpu.memory_space<vmem>>, vector<1x128x128xbf16>
    %34 = vector.shape_cast %33 : vector<1x128x128xbf16> to vector<128x128xbf16>
    %cst_37 = arith.constant dense<0.000000e+00> : vector<32x128xf32>
    %35 = tpu.matmul %32, %34, %cst_37 {dimension_numbers = #tpu.dot_dimension_numbers<[1], [0], [0], [1], [0, 0, 1, 1], [], []>} : vector<32x128xbf16>, vector<128x128xbf16>, vector<32x128xf32> -> vector<32x128xf32>
    %36 = arith.addf %29, %35 : vector<32x128xf32>
    %c0_38 = arith.constant 0 : index
    %c1_39 = arith.constant 1 : index
    %c0_40 = arith.constant 0 : index
    %37 = vector.load %arg7[%c0_38, %c1_39, %c0_40] : memref<2x18x128xf32, #tpu.memory_space<vmem>>, vector<2x16x128xf32>
    %38 = vector.shape_cast %37 : vector<2x16x128xf32> to vector<32x128xf32>
    %39 = arith.truncf %38 : vector<32x128xf32> to vector<32x128xbf16>
    %c1_41 = arith.constant 1 : index
    %c0_42 = arith.constant 0 : index
    %c0_43 = arith.constant 0 : index
    %40 = vector.load %arg4[%c1_41, %c0_42, %c0_43] : memref<3x128x128xbf16, #tpu.memory_space<vmem>>, vector<1x128x128xbf16>
    %41 = vector.shape_cast %40 : vector<1x128x128xbf16> to vector<128x128xbf16>
    %cst_44 = arith.constant dense<0.000000e+00> : vector<32x128xf32>
    %42 = tpu.matmul %39, %41, %cst_44 {dimension_numbers = #tpu.dot_dimension_numbers<[1], [0], [0], [1], [0, 0, 1, 1], [], []>} : vector<32x128xbf16>, vector<128x128xbf16>, vector<32x128xf32> -> vector<32x128xf32>
    %43 = arith.addf %36, %42 : vector<32x128xf32>
    %c0_45 = arith.constant 0 : index
    %c2_46 = arith.constant 2 : index
    %c0_47 = arith.constant 0 : index
    %44 = vector.load %arg7[%c0_45, %c2_46, %c0_47] : memref<2x18x128xf32, #tpu.memory_space<vmem>>, vector<2x16x128xf32>
    %45 = vector.shape_cast %44 : vector<2x16x128xf32> to vector<32x128xf32>
    %46 = arith.truncf %45 : vector<32x128xf32> to vector<32x128xbf16>
    %c2_48 = arith.constant 2 : index
    %c0_49 = arith.constant 0 : index
    %c0_50 = arith.constant 0 : index
    %47 = vector.load %arg4[%c2_48, %c0_49, %c0_50] : memref<3x128x128xbf16, #tpu.memory_space<vmem>>, vector<1x128x128xbf16>
    %48 = vector.shape_cast %47 : vector<1x128x128xbf16> to vector<128x128xbf16>
    %cst_51 = arith.constant dense<0.000000e+00> : vector<32x128xf32>
    %49 = tpu.matmul %46, %48, %cst_51 {dimension_numbers = #tpu.dot_dimension_numbers<[1], [0], [0], [1], [0, 0, 1, 1], [], []>} : vector<32x128xbf16>, vector<128x128xbf16>, vector<32x128xf32> -> vector<32x128xf32>
    %50 = arith.addf %43, %49 : vector<32x128xf32>
    %c0_52 = arith.constant 0 : index
    %c0_53 = arith.constant 0 : index
    %51 = vector.load %arg5[%c0_52, %c0_53] : memref<1x128xf32, #tpu.memory_space<vmem>>, vector<1x128xf32>
    %52 = vector.broadcast %51 : vector<1x128xf32> to vector<32x128xf32>
    %53 = arith.addf %50, %52 : vector<32x128xf32>
    %cst_54 = arith.constant 0.000000e+00 : f32
    %54 = vector.broadcast %cst_54 : f32 to vector<32x128xf32>
    %55 = arith.maximumf %53, %54 : vector<32x128xf32>
    %56 = vector.shape_cast %55 : vector<32x128xf32> to vector<2x16x128xf32>
    %c0_55 = arith.constant 0 : index
    %c0_56 = arith.constant 0 : index
    %c0_57 = arith.constant 0 : index
    %57 = vector.load %arg6[%c0_55, %c0_56, %c0_57] : memref<2x16x128xf32, #tpu.memory_space<vmem>>, vector<2x16x128xf32>
    tpu.vector_store %arg6[%c0_55, %c0_56, %c0_57], %56 {strides = array<i32>} : memref<2x16x128xf32, #tpu.memory_space<vmem>>, vector<2x16x128xf32>,
    return
  }
  func.func @transform_0(%arg0: i32) -> (i32, i32, i32) {
    %c0_i32 = arith.constant 0 : i32
    %c0_i32_0 = arith.constant 0 : i32
    %c0_i32_1 = arith.constant 0 : i32
    return %arg0, %c0_i32, %c0_i32_0 : i32, i32, i32
  }
  func.func @transform_1(%arg0: i32) -> (i32, i32, i32) {
    %c0_i32 = arith.constant 0 : i32
    %c0_i32_0 = arith.constant 0 : i32
    %c0_i32_1 = arith.constant 0 : i32
    %c0_i32_2 = arith.constant 0 : i32
    return %c0_i32, %c0_i32_0, %c0_i32_1 : i32, i32, i32
  }
  func.func @transform_2(%arg0: i32) -> (i32, i32) {
    %c0_i32 = arith.constant 0 : i32
    %c0_i32_0 = arith.constant 0 : i32
    %c0_i32_1 = arith.constant 0 : i32
    return %c0_i32, %c0_i32_0 : i32, i32
  }
  func.func @transform_3(%arg0: i32) -> (i32, i32, i32) {
    %c0_i32 = arith.constant 0 : i32
    %c0_i32_0 = arith.constant 0 : i32
    %c0_i32_1 = arith.constant 0 : i32
    %c0_i32_2 = arith.constant 0 : i32
    return %c0_i32, %c0_i32_0, %c0_i32_1 : i32, i32, i32
  }
  func.func @transform_4(%arg0: i32) -> (i32, i32) {
    %c0_i32 = arith.constant 0 : i32
    %c0_i32_0 = arith.constant 0 : i32
    %c0_i32_1 = arith.constant 0 : i32
    return %c0_i32, %c0_i32_0 : i32, i32
  }
  func.func @transform_5(%arg0: i32) -> (i32, i32, i32) {
    %c0_i32 = arith.constant 0 : i32
    %c0_i32_0 = arith.constant 0 : i32
    %c0_i32_1 = arith.constant 0 : i32
    return %arg0, %c0_i32, %c0_i32_0 : i32, i32, i32
  }
}

</mosaic_0001>

<llo_original>
// kernel: tile.13
$region0: #{tile.13}
  #allocation0 [shape = 's32[1]{0}', space=sflag, size = 0x4, scoped, tag = 'scoped memory for tile.13']
  %s0 = inlined_call_operand.vmem [shape: f32[8], index: 0, kind: input, shape index: {}]
  %s1 = inlined_call_operand.vmem [shape: f32[16,8], index: 1, kind: output, shape index: {}]
  // Predicated region
  $region2: #{tile.13} parent=0 // pred_check
    _
  $region3: #{tile.13} parent=0 // pred_check_branch
    %3 = sbr.rel (0) target = $region5
  $region4: #{tile.13} parent=0 // pred_region
    _
  $region5: #{tile.13} parent=0 // pred_fallthru
    _
  %v4 = vld [vmem:[%s0] ss:$0 sm:$0xff]
  %5 = vst [vmem:[%s1] sm:$0xff] %v4
  %s6 = scalar_lea.vmem %s1, 8
  %7 = vst [vmem:[%s6] sm:$0xff] %v4

// kernel: tile.14
$region0: #{tile.14}
  %s0 = inlined_call_operand.vmem [shape: f32[16,8], index: 0, kind: input, shape index: {}]
  %s1 = inlined_call_operand.vmem [shape: f32[1,128], index: 1, kind: output, shape index: {}]
  $region1: #{tile.14} parent=0
    #allocation0 [shape = 'u8[4096]{0}', space=vmem, size = 0x1000, scoped, tag = 'scoped mem for output reshape']
    %v2 = vld [vmem:[%s0] sm:$0x1]
    %vm3 = vcmask 64512
    %4 = vst.msk [vmem:[#allocation0] sm:$0x1] %vm3, %v2
    %s5 = scalar_lea.vmem %s0, 15
    %v6 = vld [vmem:[%s5] sm:$0x1]
    %7 = vrot.lane.b32.xlu0 %v6, 120
    %v8 = vpop.permute.xlu0 %7
    %vm9 = vcmask 1048512
    %10 = vst.msk [vmem:[#allocation0] sm:$0x1] %vm9, %v8
    %s11 = scalar_lea.vmem %s0, 14
    %v12 = vld [vmem:[%s11] sm:$0x1]
    %13 = vrot.lane.b32.xlu0 %v12, 112
    %v14 = vpop.permute.xlu0 %13
    %vm15 = vcmask 982912
    %16 = vst.msk [vmem:[#allocation0] sm:$0x1] %vm15, %v14
    %s17 = scalar_lea.vmem %s0, 13
    %v18 = vld [vmem:[%s17] sm:$0x1]
    %19 = vrot.lane.b32.xlu0 %v18, 104
    %v20 = vpop.permute.xlu0 %19
    %vm21 = vcmask 917312
    %22 = vst.msk [vmem:[#allocation0] sm:$0x1] %vm21, %v20
    %s23 = scalar_lea.vmem %s0, 12
    %v24 = vld [vmem:[%s23] sm:$0x1]
    %25 = vrot.lane.b32.xlu0 %v24, 96
    %v26 = vpop.permute.xlu0 %25
    %vm27 = vcmask 851712
    %28 = vst.msk [vmem:[#allocation0] sm:$0x1] %vm27, %v26
    %s29 = scalar_lea.vmem %s0, 11
    %v30 = vld [vmem:[%s29] sm:$0x1]
    %31 = vrot.lane.b32.xlu0 %v30, 88
    %v32 = vpop.permute.xlu0 %31
    %vm33 = vcmask 786112
    %34 = vst.msk [vmem:[#allocation0] sm:$0x1] %vm33, %v32
    %s35 = scalar_lea.vmem %s0, 10
    %v36 = vld [vmem:[%s35] sm:$0x1]
    %37 = vrot.lane.b32.xlu0 %v36, 80
    %v38 = vpop.permute.xlu0 %37
    %vm39 = vcmask 720512
    %40 = vst.msk [vmem:[#allocation0] sm:$0x1] %vm39, %v38
    %s41 = scalar_lea.vmem %s0, 9
    %v42 = vld [vmem:[%s41] sm:$0x1]
    %43 = vrot.lane.b32.xlu0 %v42, 72
    %v44 = vpop.permute.xlu0 %43
    %vm45 = vcmask 654912
    %46 = vst.msk [vmem:[#allocation0] sm:$0x1] %vm45, %v44
    %s47 = scalar_lea.vmem %s0, 8
    %v48 = vld [vmem:[%s47] sm:$0x1]
    %49 = vrot.lane.b32.xlu0 %v48, 64
    %v50 = vpop.permute.xlu0 %49
    %vm51 = vcmask 589312
    %52 = vst.msk [vmem:[#allocation0] sm:$0x1] %vm51, %v50
    %s53 = scalar_lea.vmem %s0, 7
    %v54 = vld [vmem:[%s53] sm:$0x1]
    %55 = vrot.lane.b32.xlu0 %v54, 56
    %v56 = vpop.permute.xlu0 %55
    %vm57 = vcmask 523712
    %58 = vst.msk [vmem:[#allocation0] sm:$0x1] %vm57, %v56
    %s59 = scalar_lea.vmem %s0, 6
    %v60 = vld [vmem:[%s59] sm:$0x1]
    %61 = vrot.lane.b32.xlu0 %v60, 48
    %v62 = vpop.permute.xlu0 %61
    %vm63 = vcmask 458112
    %64 = vst.msk [vmem:[#allocation0] sm:$0x1] %vm63, %v62
    %s65 = scalar_lea.vmem %s0, 5
    %v66 = vld [vmem:[%s65] sm:$0x1]
    %67 = vrot.lane.b32.xlu0 %v66, 40
    %v68 = vpop.permute.xlu0 %67
    %vm69 = vcmask 392512
    %70 = vst.msk [vmem:[#allocation0] sm:$0x1] %vm69, %v68
    %s71 = scalar_lea.vmem %s0, 4
    %v72 = vld [vmem:[%s71] sm:$0x1]
    %73 = vrot.lane.b32.xlu0 %v72, 32
    %v74 = vpop.permute.xlu0 %73
    %vm75 = vcmask 326912
    %76 = vst.msk [vmem:[#allocation0] sm:$0x1] %vm75, %v74
    %s77 = scalar_lea.vmem %s0, 3
    %v78 = vld [vmem:[%s77] sm:$0x1]
    %79 = vrot.lane.b32.xlu0 %v78, 24
    %v80 = vpop.permute.xlu0 %79
    %vm81 = vcmask 261312
    %82 = vst.msk [vmem:[#allocation0] sm:$0x1] %vm81, %v80
    %s83 = scalar_lea.vmem %s0, 2
    %v84 = vld [vmem:[%s83] sm:$0x1]
    %85 = vrot.lane.b32.xlu0 %v84, 16
    %v86 = vpop.permute.xlu0 %85
    %vm87 = vcmask 195712
    %88 = vst.msk [vmem:[#allocation0] sm:$0x1] %vm87, %v86
    %s89 = scalar_lea.vmem %s0, 1
    %v90 = vld [vmem:[%s89] sm:$0x1]
    %91 = vrot.lane.b32.xlu0 %v90, 8
    %v92 = vpop.permute.xlu0 %91
    %vm93 = vcmask 130112
    %94 = vst.msk [vmem:[#allocation0] sm:$0x1] %vm93, %v92
    %s96 = sshllo.u32 0, 1
    %v98 = vld [vmem:[#allocation0] sm:%s96]
    %s99 = sshllo.u32 0, 1
    %100 = vst [vmem:[%s1] sm:%s99] %v98

// kernel: twice_conv_pallas.1
$region0: #{twice_conv_pallas.1}
  #allocation0 [shape = 'u32[]', space=smem, size = 0x4, offset = 0x4, fixed_abs, tag = 'smem constant byte address 0x4 - core index']
  #allocation1 [shape = 'u32[144,128]{1,0:T(1,128)}', space=vmem, size = 0x12000, scoped, tag = 'internal scratch']
  #allocation2 [shape = 'f32[2,18,128]{2,1,0:T(8,128)}', space=vmem, size = 0x6000, scoped, tag = 'scratch operand']
  %s0 = inlined_call_operand.vmem [shape: bf16[2,18,64], index: 0, kind: input, shape index: {}]
  %s1 = inlined_call_operand.vmem [shape: bf16[3,64,128], index: 1, kind: input, shape index: {}]
  %s2 = inlined_call_operand.vmem [shape: f32[1,128], index: 2, kind: input, shape index: {}]
  %s3 = inlined_call_operand.vmem [shape: bf16[3,128,128], index: 3, kind: input, shape index: {}]
  %s4 = inlined_call_operand.vmem [shape: f32[1,128], index: 4, kind: input, shape index: {}]
  %s5 = inlined_call_operand.vmem [shape: f32[2,16,128], index: 5, kind: output, shape index: {}]
  %s6 = sld [smem:[#allocation0]]
  $region30: #{twice_conv_pallas.1} parent=0
    _
  %s8 = ssub.s32 1, %s6
  %s9 = scalar_select 0, %s8, %s6
  // Predicated region
  $region2: #{twice_conv_pallas.1} parent=0 // pred_check
    _
  $region3: #{twice_conv_pallas.1} parent=0 // pred_check_branch
    %11 = sbr.rel (0) target = $region5
  $region4: #{twice_conv_pallas.1} parent=0 // pred_region
    _
  $region5: #{twice_conv_pallas.1} parent=0 // pred_fallthru
    _
  // Predicated region
  $region6: #{twice_conv_pallas.1} parent=0 // pred_check
    _
  $region7: #{twice_conv_pallas.1} parent=0 // pred_check_branch
    %13 = sbr.rel (0) target = $region9
  $region8: #{twice_conv_pallas.1} parent=0 // pred_region
    _
  $region9: #{twice_conv_pallas.1} parent=0 // pred_fallthru
    _
  // Predicated region
  $region10: #{twice_conv_pallas.1} parent=0 // pred_check
    _
  $region11: #{twice_conv_pallas.1} parent=0 // pred_check_branch
    %15 = sbr.rel (0) target = $region13
  $region12: #{twice_conv_pallas.1} parent=0 // pred_region
    _
  $region13: #{twice_conv_pallas.1} parent=0 // pred_fallthru
    _
  // Predicated region
  $region14: #{twice_conv_pallas.1} parent=0 // pred_check
    _
  $region15: #{twice_conv_pallas.1} parent=0 // pred_check_branch
    %17 = sbr.rel (0) target = $region17
  $region16: #{twice_conv_pallas.1} parent=0 // pred_region
    _
  $region17: #{twice_conv_pallas.1} parent=0 // pred_fallthru
    _
  // Predicated region
  $region18: #{twice_conv_pallas.1} parent=0 // pred_check
    _
  $region19: #{twice_conv_pallas.1} parent=0 // pred_check_branch
    %19 = sbr.rel (0) target = $region21
  $region20: #{twice_conv_pallas.1} parent=0 // pred_region
    _
  $region21: #{twice_conv_pallas.1} parent=0 // pred_fallthru
    _
  %v21 = vld [vmem:[%s0] sm:$0xf]
  %v22 = vld [vmem:[%s0 + $0x4] sm:$0xf]
  %v23 = vld [vmem:[%s0 + $0xc] sm:$0xf]
  %v24 = vld [vmem:[%s0 + $0x10] sm:$0xf]
  %v25 = vld [vmem:[%s1] sm:$0xf]
  %v26 = vld [vmem:[%s1 + $0x4] sm:$0xf]
  %v27 = vld [vmem:[%s1 + $0x8] sm:$0xf]
  %v28 = vld [vmem:[%s1 + $0xc] sm:$0xf]
  %v29 = vld [vmem:[%s1 + $0x10] sm:$0xf]
  %v30 = vld [vmem:[%s1 + $0x14] sm:$0xf]
  %v31 = vld [vmem:[%s1 + $0x18] sm:$0xf]
  %v32 = vld [vmem:[%s1 + $0x1c] sm:$0xf]
  %v33 = vld [vmem:[%s0 + $0x8] sm:$0x1]
  %v34 = vld [vmem:[%s0 + $0x14] sm:$0x1]
  %vm35 = vsmask.f32 3328
  %vm36 = vsmask.f32 7440
  %vm37 = vmor %vm35, %vm36
  %v39 = vshrl.u32 %v21, 16
  %v41 = vrot.slane %v39, 4
  %v42 = vshll.u32 %v21, 16
  %v44 = vrot.slane %v42, 5
  %v45 = vor.u32 %v41, %v44
  %v46 = vrot.slane %v45, 4
  %v48 = vshll.u32 %v22, 16
  %v50 = vrot.slane %v48, 5
  %v51 = vsel %vm37, %v46, %v50
  %v52 = vshrl.u32 %v22, 16
  %v54 = vrot.slane %v52, 4
  %v55 = vor.u32 %v54, %v50
  %v56 = vrot.slane %v55, 4
  %v58 = vshll.u32 %v33, 16
  %v60 = vrot.slane %v58, 5
  %v61 = vsel %vm37, %v56, %v60
  %v63 = vshrl.u32 %v23, 16
  %v65 = vrot.slane %v63, 4
  %v66 = vshll.u32 %v23, 16
  %v68 = vrot.slane %v66, 5
  %v69 = vor.u32 %v65, %v68
  %v70 = vrot.slane %v69, 4
  %v72 = vshll.u32 %v24, 16
  %v74 = vrot.slane %v72, 5
  %v75 = vsel %vm37, %v70, %v74
  %v76 = vshrl.u32 %v24, 16
  %v78 = vrot.slane %v76, 4
  %v79 = vor.u32 %v78, %v74
  %v80 = vrot.slane %v79, 4
  %v82 = vshll.u32 %v34, 16
  %v84 = vrot.slane %v82, 5
  %v85 = vsel %vm37, %v80, %v84
  %s86 = scalar_lea.vmem %s1, 32
  %v87 = vld [vmem:[%s86] sm:$0xf]
  %v88 = vld [vmem:[%s86 + $0x4] sm:$0xf]
  %v89 = vld [vmem:[%s86 + $0x8] sm:$0xf]
  %v90 = vld [vmem:[%s86 + $0xc] sm:$0xf]
  %v91 = vld [vmem:[%s86 + $0x10] sm:$0xf]
  %v92 = vld [vmem:[%s86 + $0x14] sm:$0xf]
  %v93 = vld [vmem:[%s86 + $0x18] sm:$0xf]
  %v94 = vld [vmem:[%s86 + $0x1c] sm:$0xf]
  %v95 = vunpack.c.l.b16 %v51
  %v96 = vunpack.c.l.b16 %v61
  %v97 = vunpack.c.l.b16 %v75
  %v98 = vunpack.c.l.b16 %v85
  %v99 = vpack.c.b16 %v96, %v95
  %v100 = vpack.c.b16 %v98, %v97
  %v109 = vunpack.c.l.b16 %v87
  %v110 = vunpack.c.l.b16 %v88
  %v111 = vunpack.c.l.b16 %v89
  %v112 = vunpack.c.l.b16 %v90
  %v113 = vunpack.c.l.b16 %v91
  %v114 = vunpack.c.l.b16 %v92
  %v115 = vunpack.c.l.b16 %v93
  %v116 = vunpack.c.l.b16 %v94
  %v117 = vpack.c.b16 %v110, %v109
  %v118 = vpack.c.b16 %v112, %v111
  %v119 = vpack.c.b16 %v114, %v113
  %v120 = vpack.c.b16 %v116, %v115
  %vm125 = vcmask 523264
  %v127 = vsel %vm125, %v99, 0
  %v130 = vsel %vm125, %v100, 0
  %132 = vmatprep.subr.bf16.mxu0 0
  %133 = vmatpush1.bf16.msra.mxu0 %v117
  %134 = vmatprep.subr.bf16.mxu0 0
  %135 = vmatpush1.bf16.msra.mxu0 %v118
  %136 = vmatprep.subr.bf16.mxu0 0
  %137 = vmatpush1.bf16.msra.mxu0 %v119
  %138 = vmatprep.subr.bf16.mxu0 0
  %139 = vmatpush1.bf16.msra.mxu0 %v120
  %140 = vmatprep.subr.bf16.mxu0 0
  %141 = vmatpush1.bf16.msra.mxu0 0
  %142 = vmatprep.subr.bf16.mxu0 0
  %143 = vmatpush1.bf16.msra.mxu0 0
  %144 = vmatprep.subr.bf16.mxu0 0
  %145 = vmatpush1.bf16.msra.mxu0 0
  %146 = vmatprep.subr.bf16.mxu0 0
  %147 = vmatpush1.bf16.msra.mxu0 0
  %148 = vmatprep.subr.bf16.mxu0 0
  %149 = vmatpush1.bf16.msra.mxu0 0
  %150 = vmatprep.subr.bf16.mxu0 0
  %151 = vmatpush1.bf16.msra.mxu0 0
  %152 = vmatprep.subr.bf16.mxu0 0
  %153 = vmatpush1.bf16.msra.mxu0 0
  %154 = vmatprep.subr.bf16.mxu0 0
  %155 = vmatpush1.bf16.msra.mxu0 0
  %156 = vmatprep.subr.bf16.mxu0 0
  %157 = vmatpush1.bf16.msra.mxu0 0
  %158 = vmatprep.subr.bf16.mxu0 0
  %159 = vmatpush1.bf16.msra.mxu0 0
  %160 = vmatprep.subr.bf16.mxu0 0
  %161 = vmatpush1.bf16.msra.mxu0 0
  %162 = vmatprep.subr.bf16.mxu0 0
  %163 = vmatpush1.bf16.msra.mxu0 0
  %164 = vmatprep.mubr.bf16.mxu0 0
  %165 = vmatmul.mubr.bf16.gmra.mrb[0].mxu0 %v127
  %v166 = vpop.f32.mrb[0].mxu0
  %v167 = vadd.f32 0.0, %v166
  %v168 = vpop.f32.mrb[0].mxu0
  %v169 = vpop.f32.mrb[0].mxu0
  %v170 = vadd.f32 0.0, %v169
  %v171 = vpop.f32.mrb[0].mxu0
  %172 = vmatprep.mubr.bf16.mxu0 0
  %173 = vmatmul.mubr.bf16.gmra.mrb[0].mxu0 %v130
  %v174 = vpop.f32.mrb[0].mxu0
  %v175 = vadd.f32 0.0, %v174
  %v176 = vpop.f32.mrb[0].mxu0
  %v177 = vpop.f32.mrb[0].mxu0
  %v178 = vadd.f32 0.0, %v177
  %v179 = vpop.f32.mrb[0].mxu0
  %180 = vdwg.mxu0
  %v185 = vunpack.c.l.b16 %v21
  %v186 = vunpack.c.l.b16 %v22
  %v187 = vunpack.c.l.b16 %v23
  %v188 = vunpack.c.l.b16 %v24
  %v189 = vpack.c.b16 %v186, %v185
  %v190 = vpack.c.b16 %v188, %v187
  %v199 = vunpack.c.l.b16 %v25
  %v200 = vunpack.c.l.b16 %v26
  %v201 = vunpack.c.l.b16 %v27
  %v202 = vunpack.c.l.b16 %v28
  %v203 = vunpack.c.l.b16 %v29
  %v204 = vunpack.c.l.b16 %v30
  %v205 = vunpack.c.l.b16 %v31
  %v206 = vunpack.c.l.b16 %v32
  %v207 = vpack.c.b16 %v200, %v199
  %v208 = vpack.c.b16 %v202, %v201
  %v209 = vpack.c.b16 %v204, %v203
  %v210 = vpack.c.b16 %v206, %v205
  %v216 = vsel %vm125, %v189, 0
  %v219 = vsel %vm125, %v190, 0
  %221 = vmatprep.subr.bf16.mxu0 0
  %222 = vmatpush1.bf16.msra.mxu0 %v207
  %223 = vmatprep.subr.bf16.mxu0 0
  %224 = vmatpush1.bf16.msra.mxu0 %v208
  %225 = vmatprep.subr.bf16.mxu0 0
  %226 = vmatpush1.bf16.msra.mxu0 %v209
  %227 = vmatprep.subr.bf16.mxu0 0
  %228 = vmatpush1.bf16.msra.mxu0 %v210
  %229 = vmatprep.subr.bf16.mxu0 0
  %230 = vmatpush1.bf16.msra.mxu0 0
  %231 = vmatprep.subr.bf16.mxu0 0
  %232 = vmatpush1.bf16.msra.mxu0 0
  %233 = vmatprep.subr.bf16.mxu0 0
  %234 = vmatpush1.bf16.msra.mxu0 0
  %235 = vmatprep.subr.bf16.mxu0 0
  %236 = vmatpush1.bf16.msra.mxu0 0
  %237 = vmatprep.subr.bf16.mxu0 0
  %238 = vmatpush1.bf16.msra.mxu0 0
  %239 = vmatprep.subr.bf16.mxu0 0
  %240 = vmatpush1.bf16.msra.mxu0 0
  %241 = vmatprep.subr.bf16.mxu0 0
  %242 = vmatpush1.bf16.msra.mxu0 0
  %243 = vmatprep.subr.bf16.mxu0 0
  %244 = vmatpush1.bf16.msra.mxu0 0
  %245 = vmatprep.subr.bf16.mxu0 0
  %246 = vmatpush1.bf16.msra.mxu0 0
  %247 = vmatprep.subr.bf16.mxu0 0
  %248 = vmatpush1.bf16.msra.mxu0 0
  %249 = vmatprep.subr.bf16.mxu0 0
  %250 = vmatpush1.bf16.msra.mxu0 0
  %251 = vmatprep.subr.bf16.mxu0 0
  %252 = vmatpush1.bf16.msra.mxu0 0
  %253 = vmatprep.mubr.bf16.mxu0 0
  %254 = vmatmul.mubr.bf16.gmra.mrb[0].mxu0 %v216
  %v255 = vpop.f32.mrb[0].mxu0
  %v256 = vadd.f32 %v167, %v255
  %v257 = vpop.f32.mrb[0].mxu0
  %v258 = vpop.f32.mrb[0].mxu0
  %v259 = vadd.f32 %v170, %v258
  %v260 = vpop.f32.mrb[0].mxu0
  %261 = vmatprep.mubr.bf16.mxu0 0
  %262 = vmatmul.mubr.bf16.gmra.mrb[0].mxu0 %v219
  %v263 = vpop.f32.mrb[0].mxu0
  %v264 = vadd.f32 %v175, %v263
  %v265 = vpop.f32.mrb[0].mxu0
  %v266 = vpop.f32.mrb[0].mxu0
  %v267 = vadd.f32 %v178, %v266
  %v268 = vpop.f32.mrb[0].mxu0
  %269 = vdwg.mxu0
  %v270 = vld [vmem:[%s0] sm:$0xe]
  %v271 = vld [vmem:[%s0 + $0xc] sm:$0xe]
  %vm276 = vcmask 1042432
  %vm277 = vcmask 1046532
  %vm278 = vmor %vm276, %vm277
  %v279 = vrot.slane %v270, 5
  %v280 = vrot.slane %v279, 4
  %v281 = vrot.slane %v22, 5
  %v282 = vsel %vm278, %v280, %v281
  %v283 = vrot.slane %v281, 4
  %v284 = vrot.slane %v33, 5
  %v285 = vsel %vm278, %v283, %v284
  %v286 = vrot.slane %v271, 5
  %v287 = vrot.slane %v286, 4
  %v288 = vrot.slane %v24, 5
  %v289 = vsel %vm278, %v287, %v288
  %v290 = vrot.slane %v288, 4
  %v291 = vrot.slane %v34, 5
  %v292 = vsel %vm278, %v290, %v291
  %s293 = scalar_lea.vmem %s1, 64
  %v294 = vld [vmem:[%s293] sm:$0xf]
  %v295 = vld [vmem:[%s293 + $0x4] sm:$0xf]
  %v296 = vld [vmem:[%s293 + $0x8] sm:$0xf]
  %v297 = vld [vmem:[%s293 + $0xc] sm:$0xf]
  %v298 = vld [vmem:[%s293 + $0x10] sm:$0xf]
  %v299 = vld [vmem:[%s293 + $0x14] sm:$0xf]
  %v300 = vld [vmem:[%s293 + $0x18] sm:$0xf]
  %v301 = vld [vmem:[%s293 + $0x1c] sm:$0xf]
  %v302 = vunpack.c.l.b16 %v282
  %v303 = vunpack.c.l.b16 %v285
  %v304 = vunpack.c.l.b16 %v289
  %v305 = vunpack.c.l.b16 %v292
  %v306 = vpack.c.b16 %v303, %v302
  %v307 = vpack.c.b16 %v305, %v304
  %v316 = vunpack.c.l.b16 %v294
  %v317 = vunpack.c.l.b16 %v295
  %v318 = vunpack.c.l.b16 %v296
  %v319 = vunpack.c.l.b16 %v297
  %v320 = vunpack.c.l.b16 %v298
  %v321 = vunpack.c.l.b16 %v299
  %v322 = vunpack.c.l.b16 %v300
  %v323 = vunpack.c.l.b16 %v301
  %v324 = vpack.c.b16 %v317, %v316
  %v325 = vpack.c.b16 %v319, %v318
  %v326 = vpack.c.b16 %v321, %v320
  %v327 = vpack.c.b16 %v323, %v322
  %v333 = vsel %vm125, %v306, 0
  %v336 = vsel %vm125, %v307, 0
  %338 = vmatprep.subr.bf16.mxu0 0
  %339 = vmatpush1.bf16.msra.mxu0 %v324
  %340 = vmatprep.subr.bf16.mxu0 0
  %341 = vmatpush1.bf16.msra.mxu0 %v325
  %342 = vmatprep.subr.bf16.mxu0 0
  %343 = vmatpush1.bf16.msra.mxu0 %v326
  %344 = vmatprep.subr.bf16.mxu0 0
  %345 = vmatpush1.bf16.msra.mxu0 %v327
  %346 = vmatprep.subr.bf16.mxu0 0
  %347 = vmatpush1.bf16.msra.mxu0 0
  %348 = vmatprep.subr.bf16.mxu0 0
  %349 = vmatpush1.bf16.msra.mxu0 0
  %350 = vmatprep.subr.bf16.mxu0 0
  %351 = vmatpush1.bf16.msra.mxu0 0
  %352 = vmatprep.subr.bf16.mxu0 0
  %353 = vmatpush1.bf16.msra.mxu0 0
  %354 = vmatprep.subr.bf16.mxu0 0
  %355 = vmatpush1.bf16.msra.mxu0 0
  %356 = vmatprep.subr.bf16.mxu0 0
  %357 = vmatpush1.bf16.msra.mxu0 0
  %358 = vmatprep.subr.bf16.mxu0 0
  %359 = vmatpush1.bf16.msra.mxu0 0
  %360 = vmatprep.subr.bf16.mxu0 0
  %361 = vmatpush1.bf16.msra.mxu0 0
  %362 = vmatprep.subr.bf16.mxu0 0
  %363 = vmatpush1.bf16.msra.mxu0 0
  %364 = vmatprep.subr.bf16.mxu0 0
  %365 = vmatpush1.bf16.msra.mxu0 0
  %366 = vmatprep.subr.bf16.mxu0 0
  %367 = vmatpush1.bf16.msra.mxu0 0
  %368 = vmatprep.subr.bf16.mxu0 0
  %369 = vmatpush1.bf16.msra.mxu0 0
  %370 = vmatprep.mubr.bf16.mxu0 0
  %371 = vmatmul.mubr.bf16.gmra.mrb[0].mxu0 %v333
  %v372 = vpop.f32.mrb[0].mxu0
  %v373 = vadd.f32 0.0, %v372
  %v374 = vpop.f32.mrb[0].mxu0
  %v375 = vpop.f32.mrb[0].mxu0
  %v376 = vadd.f32 0.0, %v375
  %v377 = vpop.f32.mrb[0].mxu0
  %378 = vmatprep.mubr.bf16.mxu0 0
  %379 = vmatmul.mubr.bf16.gmra.mrb[0].mxu0 %v336
  %v380 = vpop.f32.mrb[0].mxu0
  %v381 = vadd.f32 0.0, %v380
  %v382 = vpop.f32.mrb[0].mxu0
  %v383 = vpop.f32.mrb[0].mxu0
  %v384 = vadd.f32 0.0, %v383
  %v385 = vpop.f32.mrb[0].mxu0
  %386 = vdwg.mxu0
  %v387 = vadd.f32 %v256, %v373
  %v388 = vadd.f32 %v259, %v376
  %v389 = vadd.f32 %v264, %v381
  %v390 = vadd.f32 %v267, %v384
  %v391 = vld [vmem:[%s2] sm:$0x1]
  %v393 = vlaneseq
  %v394 = vshrl.u32 %v393, 7
  %v395 = vsub.s32 0, %v394
  %v396 = vrot.slane %v391, %v395
  %v398 = vadd.f32 %v387, %v396
  %v399 = vadd.f32 %v388, %v396
  %v400 = vadd.f32 %v389, %v396
  %v401 = vadd.f32 %v390, %v396
  %v402 = vmax.f32 %v398, 0.0
  %v403 = vmax.f32 %v399, 0.0
  %v404 = vmax.f32 %v400, 0.0
  %v405 = vmax.f32 %v401, 0.0
  %406 = vst [vmem:[#allocation2] sm:$0x1] 0.0
  %407 = vst [vmem:[#allocation2 + $0x18] sm:$0x1] 0.0
  %408 = vst [vmem:[#allocation2 + $0x11] sm:$0x1] 0.0
  %409 = vst [vmem:[#allocation2 + $0x29] sm:$0x1] 0.0
  %410 = vst [vmem:[#allocation2 + $0x1] sm:$0xff] %v402
  %411 = vst [vmem:[#allocation2 + $0x9] sm:$0xff] %v403
  %412 = vst [vmem:[#allocation2 + $0x19] sm:$0xff] %v404
  %413 = vst [vmem:[#allocation2 + $0x21] sm:$0xff] %v405
  %v414 = vld [vmem:[#allocation2] sm:$0xff]
  %v415 = vld [vmem:[#allocation2 + $0x8] sm:$0xff]
  %v416 = vld [vmem:[#allocation2 + $0x18] sm:$0xff]
  %v417 = vld [vmem:[#allocation2 + $0x20] sm:$0xff]
  %v418 = vpack.c.bf16 %v415, %v414
  %v419 = vpack.c.bf16 %v417, %v416
  %v420 = vld [vmem:[%s3] sm:$0xf]
  %v421 = vld [vmem:[%s3 + $0x4] sm:$0xf]
  %v422 = vld [vmem:[%s3 + $0x8] sm:$0xf]
  %v423 = vld [vmem:[%s3 + $0xc] sm:$0xf]
  %v424 = vld [vmem:[%s3 + $0x10] sm:$0xf]
  %v425 = vld [vmem:[%s3 + $0x14] sm:$0xf]
  %v426 = vld [vmem:[%s3 + $0x18] sm:$0xf]
  %v427 = vld [vmem:[%s3 + $0x1c] sm:$0xf]
  %v428 = vld [vmem:[%s3 + $0x20] sm:$0xf]
  %v429 = vld [vmem:[%s3 + $0x24] sm:$0xf]
  %v430 = vld [vmem:[%s3 + $0x28] sm:$0xf]
  %v431 = vld [vmem:[%s3 + $0x2c] sm:$0xf]
  %v432 = vld [vmem:[%s3 + $0x30] sm:$0xf]
  %v433 = vld [vmem:[%s3 + $0x34] sm:$0xf]
  %v434 = vld [vmem:[%s3 + $0x38] sm:$0xf]
  %v435 = vld [vmem:[%s3 + $0x3c] sm:$0xf]
  %v436 = vld [vmem:[#allocation2 + $0x1] sm:$0xff]
  %v437 = vld [vmem:[#allocation2 + $0x9] sm:$0xff]
  %v438 = vld [vmem:[#allocation2 + $0x19] sm:$0xff]
  %v439 = vld [vmem:[#allocation2 + $0x21] sm:$0xff]
  %v440 = vpack.c.bf16 %v437, %v436
  %v441 = vpack.c.bf16 %v439, %v438
  %s442 = scalar_lea.vmem %s3, 64
  %v443 = vld [vmem:[%s442] sm:$0xf]
  %v444 = vld [vmem:[%s442 + $0x4] sm:$0xf]
  %v445 = vld [vmem:[%s442 + $0x8] sm:$0xf]
  %v446 = vld [vmem:[%s442 + $0xc] sm:$0xf]
  %v447 = vld [vmem:[%s442 + $0x10] sm:$0xf]
  %v448 = vld [vmem:[%s442 + $0x14] sm:$0xf]
  %v449 = vld [vmem:[%s442 + $0x18] sm:$0xf]
  %v450 = vld [vmem:[%s442 + $0x1c] sm:$0xf]
  %v451 = vld [vmem:[%s442 + $0x20] sm:$0xf]
  %v452 = vld [vmem:[%s442 + $0x24] sm:$0xf]
  %v453 = vld [vmem:[%s442 + $0x28] sm:$0xf]
  %v454 = vld [vmem:[%s442 + $0x2c] sm:$0xf]
  %v455 = vld [vmem:[%s442 + $0x30] sm:$0xf]
  %v456 = vld [vmem:[%s442 + $0x34] sm:$0xf]
  %v457 = vld [vmem:[%s442 + $0x38] sm:$0xf]
  %v458 = vld [vmem:[%s442 + $0x3c] sm:$0xf]
  %v475 = vunpack.c.l.b16 %v443
  %v476 = vunpack.c.l.b16 %v444
  %v477 = vunpack.c.l.b16 %v445
  %v478 = vunpack.c.l.b16 %v446
  %v479 = vunpack.c.l.b16 %v447
  %v480 = vunpack.c.l.b16 %v448
  %v481 = vunpack.c.l.b16 %v449
  %v482 = vunpack.c.l.b16 %v450
  %v483 = vunpack.c.l.b16 %v451
  %v484 = vunpack.c.l.b16 %v452
  %v485 = vunpack.c.l.b16 %v453
  %v486 = vunpack.c.l.b16 %v454
  %v487 = vunpack.c.l.b16 %v455
  %v488 = vunpack.c.l.b16 %v456
  %v489 = vunpack.c.l.b16 %v457
  %v490 = vunpack.c.l.b16 %v458
  %v491 = vpack.c.b16 %v476, %v475
  %v492 = vpack.c.b16 %v478, %v477
  %v493 = vpack.c.b16 %v480, %v479
  %v494 = vpack.c.b16 %v482, %v481
  %v495 = vpack.c.b16 %v484, %v483
  %v496 = vpack.c.b16 %v486, %v485
  %v497 = vpack.c.b16 %v488, %v487
  %v498 = vpack.c.b16 %v490, %v489
  %507 = vmatprep.subr.bf16.mxu0 0
  %508 = vmatpush1.bf16.msra.mxu0 %v491
  %509 = vmatprep.subr.bf16.mxu0 0
  %510 = vmatpush1.bf16.msra.mxu0 %v492
  %511 = vmatprep.subr.bf16.mxu0 0
  %512 = vmatpush1.bf16.msra.mxu0 %v493
  %513 = vmatprep.subr.bf16.mxu0 0
  %514 = vmatpush1.bf16.msra.mxu0 %v494
  %515 = vmatprep.subr.bf16.mxu0 0
  %516 = vmatpush1.bf16.msra.mxu0 %v495
  %517 = vmatprep.subr.bf16.mxu0 0
  %518 = vmatpush1.bf16.msra.mxu0 %v496
  %519 = vmatprep.subr.bf16.mxu0 0
  %520 = vmatpush1.bf16.msra.mxu0 %v497
  %521 = vmatprep.subr.bf16.mxu0 0
  %522 = vmatpush1.bf16.msra.mxu0 %v498
  %523 = vmatprep.subr.bf16.mxu0 0
  %524 = vmatpush1.bf16.msra.mxu0 0
  %525 = vmatprep.subr.bf16.mxu0 0
  %526 = vmatpush1.bf16.msra.mxu0 0
  %527 = vmatprep.subr.bf16.mxu0 0
  %528 = vmatpush1.bf16.msra.mxu0 0
  %529 = vmatprep.subr.bf16.mxu0 0
  %530 = vmatpush1.bf16.msra.mxu0 0
  %531 = vmatprep.subr.bf16.mxu0 0
  %532 = vmatpush1.bf16.msra.mxu0 0
  %533 = vmatprep.subr.bf16.mxu0 0
  %534 = vmatpush1.bf16.msra.mxu0 0
  %535 = vmatprep.subr.bf16.mxu0 0
  %536 = vmatpush1.bf16.msra.mxu0 0
  %537 = vmatprep.subr.bf16.mxu0 0
  %538 = vmatpush1.bf16.msra.mxu0 0
  %539 = vmatprep.mubr.bf16.mxu0 0
  %540 = vmatmul.mubr.bf16.gmra.mrb[0].mxu0 %v440
  %v541 = vpop.f32.mrb[0].mxu0
  %v542 = vadd.f32 0.0, %v541
  %v543 = vpop.f32.mrb[0].mxu0
  %v544 = vpop.f32.mrb[0].mxu0
  %v545 = vadd.f32 0.0, %v544
  %v546 = vpop.f32.mrb[0].mxu0
  %547 = vmatprep.mubr.bf16.mxu0 0
  %548 = vmatmul.mubr.bf16.gmra.mrb[0].mxu0 %v441
  %v549 = vpop.f32.mrb[0].mxu0
  %v550 = vadd.f32 0.0, %v549
  %v551 = vpop.f32.mrb[0].mxu0
  %v552 = vpop.f32.mrb[0].mxu0
  %v553 = vadd.f32 0.0, %v552
  %v554 = vpop.f32.mrb[0].mxu0
  %555 = vdwg.mxu0
  %v572 = vunpack.c.l.b16 %v420
  %v573 = vunpack.c.l.b16 %v421
  %v574 = vunpack.c.l.b16 %v422
  %v575 = vunpack.c.l.b16 %v423
  %v576 = vunpack.c.l.b16 %v424
  %v577 = vunpack.c.l.b16 %v425
  %v578 = vunpack.c.l.b16 %v426
  %v579 = vunpack.c.l.b16 %v427
  %v580 = vunpack.c.l.b16 %v428
  %v581 = vunpack.c.l.b16 %v429
  %v582 = vunpack.c.l.b16 %v430
  %v583 = vunpack.c.l.b16 %v431
  %v584 = vunpack.c.l.b16 %v432
  %v585 = vunpack.c.l.b16 %v433
  %v586 = vunpack.c.l.b16 %v434
  %v587 = vunpack.c.l.b16 %v435
  %v588 = vpack.c.b16 %v573, %v572
  %v589 = vpack.c.b16 %v575, %v574
  %v590 = vpack.c.b16 %v577, %v576
  %v591 = vpack.c.b16 %v579, %v578
  %v592 = vpack.c.b16 %v581, %v580
  %v593 = vpack.c.b16 %v583, %v582
  %v594 = vpack.c.b16 %v585, %v584
  %v595 = vpack.c.b16 %v587, %v586
  %604 = vmatprep.subr.bf16.mxu0 0
  %605 = vmatpush1.bf16.msra.mxu0 %v588
  %606 = vmatprep.subr.bf16.mxu0 0
  %607 = vmatpush1.bf16.msra.mxu0 %v589
  %608 = vmatprep.subr.bf16.mxu0 0
  %609 = vmatpush1.bf16.msra.mxu0 %v590
  %610 = vmatprep.subr.bf16.mxu0 0
  %611 = vmatpush1.bf16.msra.mxu0 %v591
  %612 = vmatprep.subr.bf16.mxu0 0
  %613 = vmatpush1.bf16.msra.mxu0 %v592
  %614 = vmatprep.subr.bf16.mxu0 0
  %615 = vmatpush1.bf16.msra.mxu0 %v593
  %616 = vmatprep.subr.bf16.mxu0 0
  %617 = vmatpush1.bf16.msra.mxu0 %v594
  %618 = vmatprep.subr.bf16.mxu0 0
  %619 = vmatpush1.bf16.msra.mxu0 %v595
  %620 = vmatprep.subr.bf16.mxu0 0
  %621 = vmatpush1.bf16.msra.mxu0 0
  %622 = vmatprep.subr.bf16.mxu0 0
  %623 = vmatpush1.bf16.msra.mxu0 0
  %624 = vmatprep.subr.bf16.mxu0 0
  %625 = vmatpush1.bf16.msra.mxu0 0
  %626 = vmatprep.subr.bf16.mxu0 0
  %627 = vmatpush1.bf16.msra.mxu0 0
  %628 = vmatprep.subr.bf16.mxu0 0
  %629 = vmatpush1.bf16.msra.mxu0 0
  %630 = vmatprep.subr.bf16.mxu0 0
  %631 = vmatpush1.bf16.msra.mxu0 0
  %632 = vmatprep.subr.bf16.mxu0 0
  %633 = vmatpush1.bf16.msra.mxu0 0
  %634 = vmatprep.subr.bf16.mxu0 0
  %635 = vmatpush1.bf16.msra.mxu0 0
  %636 = vmatprep.mubr.bf16.mxu0 0
  %637 = vmatmul.mubr.bf16.gmra.mrb[0].mxu0 %v418
  %v638 = vpop.f32.mrb[0].mxu0
  %v639 = vadd.f32 %v542, %v638
  %v640 = vpop.f32.mrb[0].mxu0
  %v641 = vpop.f32.mrb[0].mxu0
  %v642 = vadd.f32 %v545, %v641
  %v643 = vpop.f32.mrb[0].mxu0
  %644 = vmatprep.mubr.bf16.mxu0 0
  %645 = vmatmul.mubr.bf16.gmra.mrb[0].mxu0 %v419
  %v646 = vpop.f32.mrb[0].mxu0
  %v647 = vadd.f32 %v550, %v646
  %v648 = vpop.f32.mrb[0].mxu0
  %v649 = vpop.f32.mrb[0].mxu0
  %v650 = vadd.f32 %v553, %v649
  %v651 = vpop.f32.mrb[0].mxu0
  %652 = vdwg.mxu0
  %v653 = vld [vmem:[#allocation2 + $0x2] sm:$0xff]
  %v654 = vld [vmem:[#allocation2 + $0xa] sm:$0xff]
  %v655 = vld [vmem:[#allocation2 + $0x1a] sm:$0xff]
  %v656 = vld [vmem:[#allocation2 + $0x22] sm:$0xff]
  %v657 = vpack.c.bf16 %v654, %v653
  %v658 = vpack.c.bf16 %v656, %v655
  %s659 = scalar_lea.vmem %s3, 128
  %v660 = vld [vmem:[%s659] sm:$0xf]
  %v661 = vld [vmem:[%s659 + $0x4] sm:$0xf]
  %v662 = vld [vmem:[%s659 + $0x8] sm:$0xf]
  %v663 = vld [vmem:[%s659 + $0xc] sm:$0xf]
  %v664 = vld [vmem:[%s659 + $0x10] sm:$0xf]
  %v665 = vld [vmem:[%s659 + $0x14] sm:$0xf]
  %v666 = vld [vmem:[%s659 + $0x18] sm:$0xf]
  %v667 = vld [vmem:[%s659 + $0x1c] sm:$0xf]
  %v668 = vld [vmem:[%s659 + $0x20] sm:$0xf]
  %v669 = vld [vmem:[%s659 + $0x24] sm:$0xf]
  %v670 = vld [vmem:[%s659 + $0x28] sm:$0xf]
  %v671 = vld [vmem:[%s659 + $0x2c] sm:$0xf]
  %v672 = vld [vmem:[%s659 + $0x30] sm:$0xf]
  %v673 = vld [vmem:[%s659 + $0x34] sm:$0xf]
  %v674 = vld [vmem:[%s659 + $0x38] sm:$0xf]
  %v675 = vld [vmem:[%s659 + $0x3c] sm:$0xf]
  %v692 = vunpack.c.l.b16 %v660
  %v693 = vunpack.c.l.b16 %v661
  %v694 = vunpack.c.l.b16 %v662
  %v695 = vunpack.c.l.b16 %v663
  %v696 = vunpack.c.l.b16 %v664
  %v697 = vunpack.c.l.b16 %v665
  %v698 = vunpack.c.l.b16 %v666
  %v699 = vunpack.c.l.b16 %v667
  %v700 = vunpack.c.l.b16 %v668
  %v701 = vunpack.c.l.b16 %v669
  %v702 = vunpack.c.l.b16 %v670
  %v703 = vunpack.c.l.b16 %v671
  %v704 = vunpack.c.l.b16 %v672
  %v705 = vunpack.c.l.b16 %v673
  %v706 = vunpack.c.l.b16 %v674
  %v707 = vunpack.c.l.b16 %v675
  %v708 = vpack.c.b16 %v693, %v692
  %v709 = vpack.c.b16 %v695, %v694
  %v710 = vpack.c.b16 %v697, %v696
  %v711 = vpack.c.b16 %v699, %v698
  %v712 = vpack.c.b16 %v701, %v700
  %v713 = vpack.c.b16 %v703, %v702
  %v714 = vpack.c.b16 %v705, %v704
  %v715 = vpack.c.b16 %v707, %v706
  %724 = vmatprep.subr.bf16.mxu0 0
  %725 = vmatpush1.bf16.msra.mxu0 %v708
  %726 = vmatprep.subr.bf16.mxu0 0
  %727 = vmatpush1.bf16.msra.mxu0 %v709
  %728 = vmatprep.subr.bf16.mxu0 0
  %729 = vmatpush1.bf16.msra.mxu0 %v710
  %730 = vmatprep.subr.bf16.mxu0 0
  %731 = vmatpush1.bf16.msra.mxu0 %v711
  %732 = vmatprep.subr.bf16.mxu0 0
  %733 = vmatpush1.bf16.msra.mxu0 %v712
  %734 = vmatprep.subr.bf16.mxu0 0
  %735 = vmatpush1.bf16.msra.mxu0 %v713
  %736 = vmatprep.subr.bf16.mxu0 0
  %737 = vmatpush1.bf16.msra.mxu0 %v714
  %738 = vmatprep.subr.bf16.mxu0 0
  %739 = vmatpush1.bf16.msra.mxu0 %v715
  %740 = vmatprep.subr.bf16.mxu0 0
  %741 = vmatpush1.bf16.msra.mxu0 0
  %742 = vmatprep.subr.bf16.mxu0 0
  %743 = vmatpush1.bf16.msra.mxu0 0
  %744 = vmatprep.subr.bf16.mxu0 0
  %745 = vmatpush1.bf16.msra.mxu0 0
  %746 = vmatprep.subr.bf16.mxu0 0
  %747 = vmatpush1.bf16.msra.mxu0 0
  %748 = vmatprep.subr.bf16.mxu0 0
  %749 = vmatpush1.bf16.msra.mxu0 0
  %750 = vmatprep.subr.bf16.mxu0 0
  %751 = vmatpush1.bf16.msra.mxu0 0
  %752 = vmatprep.subr.bf16.mxu0 0
  %753 = vmatpush1.bf16.msra.mxu0 0
  %754 = vmatprep.subr.bf16.mxu0 0
  %755 = vmatpush1.bf16.msra.mxu0 0
  %756 = vmatprep.mubr.bf16.mxu0 0
  %757 = vmatmul.mubr.bf16.gmra.mrb[0].mxu0 %v657
  %v758 = vpop.f32.mrb[0].mxu0
  %v759 = vadd.f32 0.0, %v758
  %v760 = vpop.f32.mrb[0].mxu0
  %v761 = vpop.f32.mrb[0].mxu0
  %v762 = vadd.f32 0.0, %v761
  %v763 = vpop.f32.mrb[0].mxu0
  %764 = vmatprep.mubr.bf16.mxu0 0
  %765 = vmatmul.mubr.bf16.gmra.mrb[0].mxu0 %v658
  %v766 = vpop.f32.mrb[0].mxu0
  %v767 = vadd.f32 0.0, %v766
  %v768 = vpop.f32.mrb[0].mxu0
  %v769 = vpop.f32.mrb[0].mxu0
  %v770 = vadd.f32 0.0, %v769
  %v771 = vpop.f32.mrb[0].mxu0
  %772 = vdwg.mxu0
  %v773 = vadd.f32 %v639, %v759
  %v774 = vadd.f32 %v642, %v762
  %v775 = vadd.f32 %v647, %v767
  %v776 = vadd.f32 %v650, %v770
  %v777 = vld [vmem:[%s4] sm:$0x1]
  %v779 = vlaneseq
  %v780 = vshrl.u32 %v779, 7
  %v781 = vsub.s32 0, %v780
  %v782 = vrot.slane %v777, %v781
  %v784 = vadd.f32 %v773, %v782
  %v785 = vadd.f32 %v774, %v782
  %v786 = vadd.f32 %v775, %v782
  %v787 = vadd.f32 %v776, %v782
  %v788 = vmax.f32 %v784, 0.0
  %v789 = vmax.f32 %v785, 0.0
  %v790 = vmax.f32 %v786, 0.0
  %v791 = vmax.f32 %v787, 0.0
  %792 = vst [vmem:[%s5] sm:$0xff] %v788
  %793 = vst [vmem:[%s5 + $0x8] sm:$0xff] %v789
  %794 = vst [vmem:[%s5 + $0x10] sm:$0xff] %v790
  %795 = vst [vmem:[%s5 + $0x18] sm:$0xff] %v791
  // Predicated region
  $region22: #{twice_conv_pallas.1} parent=0 // pred_check
    _
  $region23: #{twice_conv_pallas.1} parent=0 // pred_check_branch
    %797 = sbr.rel (0) target = $region25
  $region24: #{twice_conv_pallas.1} parent=0 // pred_region
    _
  $region25: #{twice_conv_pallas.1} parent=0 // pred_fallthru
    _
  // Predicated region
  $region26: #{twice_conv_pallas.1} parent=0 // pred_check
    _
  $region27: #{twice_conv_pallas.1} parent=0 // pred_check_branch
    %799 = sbr.rel (0) target = $region29
  $region28: #{twice_conv_pallas.1} parent=0 // pred_region
    _
  $region29: #{twice_conv_pallas.1} parent=0 // pred_fallthru
    _

</llo_original>
